<compile_context>
chip_gen: v7x
topology: tpu7x:2x2x1
jax: 0.10.0
libtpu: 0.0.40
codegen_flags: <defaults>
</compile_context>

<pallas_src>
import jax
import jax.numpy as jnp
from jax.experimental import pallas as pl
from jax.experimental.pallas import tpu as pltpu


# -----------------------------------------------------------------------------
# Primary forward path: forward() returns the parameter itself — identity.
# Per the performance review, no kernel is launched here (>100x win vs. the
# copy kernel for this op): the value is returned as-is / aliased by XLA.
# -----------------------------------------------------------------------------
def model_with_parameter_dict_forward(foo: jax.Array) -> jax.Array:
    """Pallas-free equivalent of ModelWithParameterDict.forward() -> module['foo']."""
    return jnp.asarray(foo)


# -----------------------------------------------------------------------------
# Optional kernel-boundary path (kept for frameworks that require a kernel).
# Output aliases the input buffer; the body is a single full-block VMEM copy
# so the (aliased) writeback is exact.
# -----------------------------------------------------------------------------
def _return_param_kernel(foo_ref, out_ref):
    # Identity: the forward pass simply returns the parameter tensor.
    out_ref[...] = foo_ref[...]


def model_with_parameter_dict_forward_pallas(foo: jax.Array) -> jax.Array:
    """Explicit-kernel variant: whole-array VMEM blocks, output aliased to input."""
    return pl.pallas_call(
        _return_param_kernel,
        out_shape=jax.ShapeDtypeStruct(foo.shape, foo.dtype),
        in_specs=[pl.BlockSpec(memory_space=pltpu.MemorySpace.VMEM)],
        out_specs=pl.BlockSpec(memory_space=pltpu.MemorySpace.VMEM),
        # Metadata-only aliasing: no separate HBM output allocation / writeback
        # target; only dispatch overhead remains.
        input_output_aliases={0: 0},
    )(foo)


def init_params(key: jax.Array):
    """Deterministic parameter init mirroring the PyTorch module's __init__."""
    k_foo, k_w, k_b = jax.random.split(key, 3)
    # nn.ParameterDict({'foo': nn.Parameter(torch.rand(10, 10))})
    foo = jax.random.uniform(k_foo, (10, 10), dtype=jnp.float32)
    # nn.Linear(10, 10) — unused in forward, created for parity only.
    bound = 1.0 / jnp.sqrt(10.0)
    other_layer_w = jax.random.uniform(
        k_w, (10, 10), dtype=jnp.float32, minval=-bound, maxval=bound
    )
    other_layer_b = jax.random.uniform(
        k_b, (10,), dtype=jnp.float32, minval=-bound, maxval=bound
    )
    return {
        "module.foo": foo,
        "other_layer.weight": other_layer_w,  # unused in forward
        "other_layer.bias": other_layer_b,    # unused in forward
    }


if __name__ == "__main__":
    params = init_params(jax.random.PRNGKey(0))
    foo = params["module.foo"]

    # Stash an independent copy of the expected value before any call that
    # might alias/donate the 'foo' buffer.
    expected = jax.block_until_ready(foo + 0.0)

    # 1) Primary (kernel-free) forward path — pure identity.
    out_direct = jax.block_until_ready(model_with_parameter_dict_forward(foo))
    assert out_direct.shape == (10, 10), out_direct.shape
    assert out_direct.dtype == jnp.float32, out_direct.dtype
    assert bool(jnp.allclose(out_direct, expected)), "direct output != parameter 'foo'"

    # 2) Explicit Pallas kernel path (aliased output) — same semantics.
    out_kernel = jax.block_until_ready(model_with_parameter_dict_forward_pallas(foo))
    assert out_kernel.shape == (10, 10), out_kernel.shape
    assert out_kernel.dtype == jnp.float32, out_kernel.dtype
    assert bool(jnp.allclose(out_kernel, expected)), "kernel output != parameter 'foo'"

    print("KERNEL_OK")
</pallas_src>

<mosaic_0001>
module attributes {stable_mosaic.version = 11 : i64} {
  func.func @_return_param_kernel(%arg0: memref<10x10xf32, #tpu.memory_space<vmem>>, %arg1: memref<10x10xf32, #tpu.memory_space<vmem>>) attributes {dimension_semantics = [], scalar_prefetch = 0 : i64, scratch_operands = 0 : i64, tpu.core_type = #tpu.core_type<tc>} {
    %c0 = arith.constant 0 : index
    %c0_0 = arith.constant 0 : index
    %0 = vector.load %arg0[%c0, %c0_0] : memref<10x10xf32, #tpu.memory_space<vmem>>, vector<10x10xf32>
    %c0_1 = arith.constant 0 : index
    %c0_2 = arith.constant 0 : index
    %1 = vector.load %arg1[%c0_1, %c0_2] : memref<10x10xf32, #tpu.memory_space<vmem>>, vector<10x10xf32>
    tpu.vector_store %arg1[%c0_1, %c0_2], %0 {strides = array<i32>} : memref<10x10xf32, #tpu.memory_space<vmem>>, vector<10x10xf32>,
    return
  }
}

</mosaic_0001>

<llo_original>
// kernel: tpu_custom_call.1
$region0: #{tpu_custom_call.1}
  #allocation0 [shape = 'u32[]', space=smem, size = 0x4, offset = 0x4, fixed_abs, tag = 'smem constant byte address 0x4 - core index']
  #allocation1 [shape = 'u32[144,128]{1,0:T(1,128)}', space=vmem, size = 0x12000, scoped, tag = 'internal scratch']
  %s0 = inlined_call_operand.hbm [shape: f32[10,10], index: 0, kind: input, shape index: {}, may-alias: {0,1}]
  %s1 = inlined_call_operand.hbm [shape: f32[10,10], index: 1, kind: output, shape index: {}, may-alias: {0,1}]
  %s2 = sld [smem:[#allocation0]]
  $region18: #{tpu_custom_call.1} parent=0
    _
  %s4 = ssub.s32 1, %s2
  %s5 = scalar_select 0, %s4, %s2
  $region1: #{tpu_custom_call.1} parent=0
    #allocation2 [shape = 'u8[8192]{0}', space=vmem, size = 0x2000, scoped, tag = 'input window, operand 0, single buffered']
    #allocation3 [shape = 's32[1]{0}', space=sflag, size = 0x4, scoped, tag = 'scoped memory for tpu_custom_call.1']
    #allocation4 [shape = 's32[1]{0}', space=sflag, size = 0x4, scoped, tag = 'scoped memory for tpu_custom_call.1']
    #allocation5 [shape = 'u8[8192]{0}', space=vmem, size = 0x2000, scoped, tag = 'output window, operand 0, single buffered']
    %6 = vsyncpa [#allocation3], 0
    %7 = vsyncpa [#allocation4], 0
    // Predicated region
    $region2: #{tpu_custom_call.1} parent=1 // pred_check
      _
    $region3: #{tpu_custom_call.1} parent=1 // pred_check_branch
      %9 = sbr.rel (0) target = $region5
    $region4: #{tpu_custom_call.1} parent=1 // pred_region
      %s11 = ssub.s32 256, 256
      %12 = vsyncadd [#allocation3], %s11
      %s13 = sshll.u32 [#allocation2], 4
      %s14 = int_to_ptr.vmem [resolvable:$true] %s13
      %19 = dma.hbm_to_vmem [thread:$0]  %s0, 256, %s14, [#allocation3], 128, 128, 8
    $region5: #{tpu_custom_call.1} parent=1 // pred_fallthru
      _
    // Predicated region
    $region6: #{tpu_custom_call.1} parent=1 // pred_check
      _
    $region7: #{tpu_custom_call.1} parent=1 // pred_check_branch
      %21 = sbr.rel (0) target = $region9
    $region8: #{tpu_custom_call.1} parent=1 // pred_region
      %22 = dma.done [#allocation3], 256
    $region9: #{tpu_custom_call.1} parent=1 // pred_fallthru
      _
    %v23 = vld [vmem:[#allocation2] sm:$0xff]
    %v24 = vld [vmem:[#allocation2 + $0x8] sm:$0x3]
    %vm25 = vcmask 80896
    %26 = vst.msk [vmem:[#allocation5] sm:$0xff] %vm25, %v23
    %vm27 = vcmask 74752
    %28 = vst.msk [vmem:[#allocation5 + $0x8] sm:$0x3] %vm27, %v24
    // Predicated region
    $region10: #{tpu_custom_call.1} parent=1 // pred_check
      _
    $region11: #{tpu_custom_call.1} parent=1 // pred_check_branch
      %30 = sbr.rel (0) target = $region13
    $region12: #{tpu_custom_call.1} parent=1 // pred_region
      %s32 = ssub.s32 256, 256
      %33 = vsyncadd [#allocation4], %s32
      %s34 = sshll.u32 [#allocation5], 4
      %s35 = int_to_ptr.vmem [resolvable:$true] %s34
      %40 = dma.vmem_to_hbm [thread:$0]  %s35, 256, %s1, [#allocation4], 128, 128, 8
    $region13: #{tpu_custom_call.1} parent=1 // pred_fallthru
      _
    // Predicated region
    $region14: #{tpu_custom_call.1} parent=1 // pred_check
      _
    $region15: #{tpu_custom_call.1} parent=1 // pred_check_branch
      %42 = sbr.rel (0) target = $region17
    $region16: #{tpu_custom_call.1} parent=1 // pred_region
      %43 = dma.done [#allocation4], 256
    $region17: #{tpu_custom_call.1} parent=1 // pred_fallthru
      _
    %44 = vsyncpa [#allocation3], 1
    %45 = vsyncpa [#allocation4], 1

</llo_original>
